<compile_context>
chip_gen: v5e
topology: v5e:2x2
jax: 0.10.0
libtpu: 0.0.40
codegen_flags: <defaults>
</compile_context>

<pallas_src>
import jax
import jax.numpy as jnp
from jax.experimental import pallas as pl
from jax.experimental.pallas import tpu as pltpu

_SUB = 8            # sublanes per f32 vreg
_LANE = 128         # lanes per vreg
_MAX_BLOCK_L = 8192  # lanes per block -> (8, 8192) f32 = 256 KiB per operand


def _round_up(x: int, m: int) -> int:
    return ((x + m - 1) // m) * m


def _dde_rhs_kernel(theta_ref, x_ref, y_ref, o_ref):
    # theta_ref: (2,) scalar-prefetch ref in SMEM. Hoist the scalar loads so
    # they are issued once per grid step, off the per-vreg critical path.
    t0 = theta_ref[0]
    t1 = theta_ref[1]
    # x_ref / y_ref / o_ref are (8, BLOCK_L) VMEM tiles -> pure VPU elementwise.
    o_ref[...] = t0 * x_ref[...] + t1 * y_ref[...]


def exponential_model_forward(theta: jax.Array,
                              x: jax.Array,
                              y: jax.Array,
                              t: jax.Array) -> jax.Array:
    """Pallas equivalent of Exponential_Model.forward.

    theta: (2,) float32 parameters [theta_0, theta_1]
    x, y : (N,) float32 vectors (same length)
    t    : (1,) tensor, unused (no explicit time dependence)
    """
    assert x.ndim == 1 and y.ndim == 1
    assert x.shape == y.shape
    assert t.size == 1
    n = x.shape[0]

    x = x.astype(jnp.float32)
    y = y.astype(jnp.float32)
    theta = theta.astype(jnp.float32)

    # Lay the 1-D state out as an (8, M) slab: full sublane occupancy and a
    # lane-dense (multiple-of-128) last dim; pad with zeros and slice after.
    m_min = pl.cdiv(n, _SUB)
    block_l = min(_MAX_BLOCK_L, _round_up(m_min, _LANE))
    m = _round_up(m_min, block_l)        # lanes per row, multiple of block_l
    n_pad = _SUB * m

    if n_pad != n:
        pad = n_pad - n
        x = jnp.pad(x, (0, pad))
        y = jnp.pad(y, (0, pad))

    x2 = x.reshape(_SUB, m)
    y2 = y.reshape(_SUB, m)

    grid = (m // block_l,)

    out = pl.pallas_call(
        _dde_rhs_kernel,
        out_shape=jax.ShapeDtypeStruct((_SUB, m), jnp.float32),
        grid_spec=pltpu.PrefetchScalarGridSpec(
            num_scalar_prefetch=1,        # theta -> SMEM before the grid runs
            grid=grid,
            in_specs=[
                pl.BlockSpec((_SUB, block_l), lambda i, theta: (0, i)),  # x
                pl.BlockSpec((_SUB, block_l), lambda i, theta: (0, i)),  # y
            ],
            out_specs=pl.BlockSpec((_SUB, block_l), lambda i, theta: (0, i)),
        ),
        compiler_params=pltpu.CompilerParams(
            dimension_semantics=("parallel",),   # shard grid across TCs (v7x)
        ),
    )(theta, x2, y2)

    return out.reshape(n_pad)[:n]


if __name__ == "__main__":
    # Deterministic parameter init matching the module defaults.
    theta = jnp.array([-2.0, -2.0], dtype=jnp.float32)

    key = jax.random.PRNGKey(0)
    kx, ky, kx2, ky2 = jax.random.split(key, 4)

    # Small 1-D state vector, consistent with the module's forward.
    N = 8
    x = jax.random.normal(kx, (N,), dtype=jnp.float32)
    y = jax.random.normal(ky, (N,), dtype=jnp.float32)
    t = jnp.array([0.5], dtype=jnp.float32)  # unused by F

    out = jax.block_until_ready(exponential_model_forward(theta, x, y, t))
    ref = theta[0] * x + theta[1] * y
    assert out.shape == (N,)
    assert jnp.allclose(out, ref, atol=1e-6, rtol=1e-6)

    # A second, lane-ragged size to exercise the padding / slab-tiling path.
    N2 = 1000
    x_big = jax.random.normal(kx2, (N2,), dtype=jnp.float32)
    y_big = jax.random.normal(ky2, (N2,), dtype=jnp.float32)
    out2 = jax.block_until_ready(exponential_model_forward(theta, x_big, y_big, t))
    ref2 = theta[0] * x_big + theta[1] * y_big
    assert out2.shape == (N2,)
    assert jnp.allclose(out2, ref2, atol=1e-6, rtol=1e-6)

    print("KERNEL_OK")
</pallas_src>

<mosaic_0001>
module attributes {stable_mosaic.version = 11 : i64} {
  func.func @_dde_rhs_kernel(%arg0: i32, %arg1: memref<2xf32, #tpu.memory_space<smem>>, %arg2: memref<8x128xf32, #tpu.memory_space<vmem>>, %arg3: memref<8x128xf32, #tpu.memory_space<vmem>>, %arg4: memref<8x128xf32, #tpu.memory_space<vmem>>) attributes {dimension_semantics = [#tpu.dimension_semantics<parallel>], iteration_bounds = array<i64: 1>, scalar_prefetch = 1 : i64, scratch_operands = 0 : i64, tpu.core_type = #tpu.core_type<tc>, window_params = [{transform_indices = @transform_0, window_bounds = array<i64: 8, 128>}, {transform_indices = @transform_1, window_bounds = array<i64: 8, 128>}, {transform_indices = @transform_2, window_bounds = array<i64: 8, 128>}]} {
    %c0 = arith.constant 0 : index
    %0 = memref.load %arg1[%c0] : memref<2xf32, #tpu.memory_space<smem>>
    %c1 = arith.constant 1 : index
    %1 = memref.load %arg1[%c1] : memref<2xf32, #tpu.memory_space<smem>>
    %c0_0 = arith.constant 0 : index
    %c0_1 = arith.constant 0 : index
    %2 = vector.load %arg2[%c0_0, %c0_1] : memref<8x128xf32, #tpu.memory_space<vmem>>, vector<8x128xf32>
    %3 = vector.broadcast %0 : f32 to vector<8x128xf32>
    %4 = arith.mulf %3, %2 : vector<8x128xf32>
    %c0_2 = arith.constant 0 : index
    %c0_3 = arith.constant 0 : index
    %5 = vector.load %arg3[%c0_2, %c0_3] : memref<8x128xf32, #tpu.memory_space<vmem>>, vector<8x128xf32>
    %6 = vector.broadcast %1 : f32 to vector<8x128xf32>
    %7 = arith.mulf %6, %5 : vector<8x128xf32>
    %8 = arith.addf %4, %7 : vector<8x128xf32>
    %c0_4 = arith.constant 0 : index
    %c0_5 = arith.constant 0 : index
    %9 = vector.load %arg4[%c0_4, %c0_5] : memref<8x128xf32, #tpu.memory_space<vmem>>, vector<8x128xf32>
    tpu.vector_store %arg4[%c0_4, %c0_5], %8 {strides = array<i32>} : memref<8x128xf32, #tpu.memory_space<vmem>>, vector<8x128xf32>,
    return
  }
  func.func @transform_0(%arg0: i32, %arg1: memref<2xf32, #tpu.memory_space<smem>>) -> (i32, i32) {
    %c0_i32 = arith.constant 0 : i32
    %c0_i32_0 = arith.constant 0 : i32
    return %c0_i32, %arg0 : i32, i32
  }
  func.func @transform_1(%arg0: i32, %arg1: memref<2xf32, #tpu.memory_space<smem>>) -> (i32, i32) {
    %c0_i32 = arith.constant 0 : i32
    %c0_i32_0 = arith.constant 0 : i32
    return %c0_i32, %arg0 : i32, i32
  }
  func.func @transform_2(%arg0: i32, %arg1: memref<2xf32, #tpu.memory_space<smem>>) -> (i32, i32) {
    %c0_i32 = arith.constant 0 : i32
    %c0_i32_0 = arith.constant 0 : i32
    return %c0_i32, %arg0 : i32, i32
  }
}

</mosaic_0001>

<llo_original>
// kernel: tpu_custom_call.1
$region0: #{tpu_custom_call.1}
  #allocation0 [shape = 'u32[]', space=smem, size = 0x4, offset = 0x4, fixed_abs, tag = 'smem constant byte address 0x4 - core index']
  #allocation1 [shape = 'u32[72,128]{1,0:T(1,128)}', space=vmem, size = 0x9000, scoped, tag = 'internal scratch']
  #allocation2 [shape = 's32[1]{0}', space=sflag, size = 0x4, scoped, tag = 'scoped memory for tpu_custom_call.1']
  #allocation3 [shape = 'u8[512]{0}', space=smem, size = 0x200, scoped, tag = 'prefetched SMEM operand 0']
  %s0 = inlined_call_operand.hbm [shape: f32[2], index: 0, kind: input, shape index: {}]
  %s1 = inlined_call_operand.hbm [shape: f32[8,128], index: 1, kind: input, shape index: {}]
  %s2 = inlined_call_operand.hbm [shape: f32[8,128], index: 2, kind: input, shape index: {}]
  %s3 = inlined_call_operand.hbm [shape: f32[8,128], index: 3, kind: output, shape index: {}]
  %s4 = sld [smem:[#allocation0]]
  $region26: #{tpu_custom_call.1} parent=0
    _
  %s6 = ssub.s32 1, %s4
  %s7 = scalar_select 0, %s6, %s4
  %s9 = sshll.u32 %s0, 4
  %s10 = int_to_ptr.hbm [resolvable:$true] %s9
  %12 = dma.hbm_to_smem %s10, 16, [#allocation3], [#allocation2]
  %14 = dma.done [#allocation2], 16
  %15 = sfence
  $region1: #{tpu_custom_call.1} parent=0
    #allocation4 [shape = 'u8[4096]{0}', space=vmem, size = 0x1000, scoped, tag = 'input window, operand 1, single buffered']
    #allocation5 [shape = 's32[1]{0}', space=sflag, size = 0x4, scoped, tag = 'scoped memory for tpu_custom_call.1']
    #allocation6 [shape = 's32[1]{0}', space=sflag, size = 0x4, scoped, tag = 'scoped memory for tpu_custom_call.1']
    #allocation7 [shape = 'u8[4096]{0}', space=vmem, size = 0x1000, scoped, tag = 'input window, operand 2, single buffered']
    #allocation8 [shape = 's32[1]{0}', space=sflag, size = 0x4, scoped, tag = 'scoped memory for tpu_custom_call.1']
    #allocation9 [shape = 'u8[4096]{0}', space=vmem, size = 0x1000, scoped, tag = 'output window, operand 0, single buffered']
    %16 = vsyncpa [#allocation5], 0
    %17 = vsyncpa [#allocation8], 0
    %18 = vsyncpa [#allocation6], 0
    // Predicated region
    $region2: #{tpu_custom_call.1} parent=1 // pred_check
      _
    $region3: #{tpu_custom_call.1} parent=1 // pred_check_branch
      %20 = sbr.rel (0) target = $region5
    $region4: #{tpu_custom_call.1} parent=1 // pred_region
      %22 = vsyncadd [#allocation5], 0
      %s24 = sshll.u32 %s1, 4
      %s25 = int_to_ptr.hbm [resolvable:$true] %s24
      %s26 = sshll.u32 [#allocation4], 4
      %s27 = int_to_ptr.vmem [resolvable:$true] %s26
      %29 = dma.hbm_to_vmem [thread:$0]  %s25, 128, %s27, [#allocation5]
    $region5: #{tpu_custom_call.1} parent=1 // pred_fallthru
      _
    // Predicated region
    $region6: #{tpu_custom_call.1} parent=1 // pred_check
      _
    $region7: #{tpu_custom_call.1} parent=1 // pred_check_branch
      %31 = sbr.rel (0) target = $region9
    $region8: #{tpu_custom_call.1} parent=1 // pred_region
      %33 = vsyncadd [#allocation8], 0
      %s35 = sshll.u32 %s2, 4
      %s36 = int_to_ptr.hbm [resolvable:$true] %s35
      %s37 = sshll.u32 [#allocation7], 4
      %s38 = int_to_ptr.vmem [resolvable:$true] %s37
      %40 = dma.hbm_to_vmem [thread:$0]  %s36, 128, %s38, [#allocation8]
    $region9: #{tpu_custom_call.1} parent=1 // pred_fallthru
      _
    // Predicated region
    $region10: #{tpu_custom_call.1} parent=1 // pred_check
      _
    $region11: #{tpu_custom_call.1} parent=1 // pred_check_branch
      %42 = sbr.rel (0) target = $region13
    $region12: #{tpu_custom_call.1} parent=1 // pred_region
      %44 = dma.done [#allocation5], 128
    $region13: #{tpu_custom_call.1} parent=1 // pred_fallthru
      _
    // Predicated region
    $region14: #{tpu_custom_call.1} parent=1 // pred_check
      _
    $region15: #{tpu_custom_call.1} parent=1 // pred_check_branch
      %46 = sbr.rel (0) target = $region17
    $region16: #{tpu_custom_call.1} parent=1 // pred_region
      %48 = dma.done [#allocation8], 128
    $region17: #{tpu_custom_call.1} parent=1 // pred_fallthru
      _
    %s49 = sld [smem:[#allocation3]]
    %s50 = sld [smem:[#allocation3 + $0x1]]
    %v51 = vld [vmem:[#allocation4] sm:$0xff]
    %v52 = vstv %s49
    %v53 = vmul.f32 %v52, %v51
    %v54 = vld [vmem:[#allocation7] sm:$0xff]
    %v55 = vstv %s50
    %v56 = vmul.f32 %v55, %v54
    %v57 = vadd.f32 %v53, %v56
    %58 = vst [vmem:[#allocation9] sm:$0xff] %v57
    // Predicated region
    $region18: #{tpu_custom_call.1} parent=1 // pred_check
      _
    $region19: #{tpu_custom_call.1} parent=1 // pred_check_branch
      %60 = sbr.rel (0) target = $region21
    $region20: #{tpu_custom_call.1} parent=1 // pred_region
      %62 = vsyncadd [#allocation6], 0
      %s64 = sshll.u32 [#allocation9], 4
      %s65 = int_to_ptr.vmem [resolvable:$true] %s64
      %s66 = sshll.u32 %s3, 4
      %s67 = int_to_ptr.hbm [resolvable:$true] %s66
      %69 = dma.vmem_to_hbm [thread:$0]  %s65, 128, %s67, [#allocation6]
    $region21: #{tpu_custom_call.1} parent=1 // pred_fallthru
      _
    // Predicated region
    $region22: #{tpu_custom_call.1} parent=1 // pred_check
      _
    $region23: #{tpu_custom_call.1} parent=1 // pred_check_branch
      %71 = sbr.rel (0) target = $region25
    $region24: #{tpu_custom_call.1} parent=1 // pred_region
      %73 = dma.done [#allocation6], 128
    $region25: #{tpu_custom_call.1} parent=1 // pred_fallthru
      _
    %74 = vsyncpa [#allocation5], 1
    %75 = vsyncpa [#allocation8], 1
    %76 = vsyncpa [#allocation6], 1

</llo_original>
